<compile_context>
chip_gen: v5e
topology: v5e:2x2
jax: 0.10.0
libtpu: 0.0.40
codegen_flags: <defaults>
</compile_context>

<pallas_src>
import functools

import jax
import jax.numpy as jnp
from jax.experimental import pallas as pl
from jax.experimental.pallas import tpu as pltpu

# ---- config (mirrors the PyTorch config dict, small synthetic sizes) ----
B = 2             # batch
SEQ_LEN = 8       # seq_len (T)
N_EMBED = 32      # n_embed (C)
NUM_HEADS = 4     # num_heads
HEAD_SIZE = N_EMBED // NUM_HEADS   # head_size = 8
DROPOUT = 0.0

NEG_INF = -1e30   # finite fill -> robust softmax


def prepare_mha_params(wq, wk, wv, wp, bp, *, num_heads=NUM_HEADS, seq_len=SEQ_LEN):
    """One-time per-layer weight prep, hoisted out of the per-call path.

    - per-head QKV weights fused + transposed to (in, out): (H, C, 3*hs),
      with the attention scale C**-0.5 folded into the Q columns,
    - output projection transposed and split by head rows: (H, hs, C),
    - bias reshaped to (1, C),
    - causal mask precomputed as an additive f32 bias (1, T, T).
    """
    C = wq.shape[0]
    hs = C // num_heads
    # NOTE: the PyTorch module scales by n_embed**-0.5 (C), not head_size**-0.5.
    scale = C ** (-0.5)

    def per_head(w_t):  # (C, C) in (in, out) layout -> (H, C, hs)
        return w_t.reshape(C, num_heads, hs).transpose(1, 0, 2)

    wqkv = jnp.concatenate(
        [per_head(wq.T * scale), per_head(wk.T), per_head(wv.T)], axis=-1
    ).astype(jnp.float32)                                        # (H, C, 3*hs)
    wp_h = wp.T.reshape(num_heads, hs, C).astype(jnp.float32)    # (H, hs, C)
    bp2 = bp.reshape(1, C).astype(jnp.float32)                   # (1, C)
    tril = jnp.tril(jnp.ones((seq_len, seq_len), dtype=bool))
    bias = jnp.where(tril, 0.0, NEG_INF).astype(jnp.float32)[None]  # (1, T, T)
    return wqkv, wp_h, bp2, bias


def _mha_kernel(x_ref, wqkv_ref, wp_ref, bp_ref, bias_ref, o_ref,
                *, batch, seq_len, num_heads):
    H = num_heads
    BT, C = x_ref.shape
    hs = C // H
    Bn, T = batch, seq_len

    # Head-batched fused QKV projection: broadcast x over the head (batch) dim,
    # single einsum with one leading batch dim.
    x = x_ref[...]                                             # (B*T, C)
    xh = jnp.broadcast_to(x[None], (H, BT, C))                 # (H, B*T, C)
    qkv = jnp.einsum("hnc,hcd->hnd", xh, wqkv_ref[...],
                     preferred_element_type=jnp.float32)       # (H, B*T, 3*hs)

    # 3 static lane slices (offsets 0/hs/2hs inside one lane tile); the
    # reshapes below only split/merge leading+sublane dims at the 8-row tile
    # boundary (free) -- the head axis never crosses lanes.
    q = qkv[:, :, :hs].reshape(H * Bn, T, hs)
    k = qkv[:, :, hs:2 * hs].reshape(H * Bn, T, hs)
    v = qkv[:, :, 2 * hs:].reshape(H * Bn, T, hs)

    # Scores (scale already folded into the Q weights) + additive causal bias.
    s = jnp.einsum("nqd,nkd->nqk", q, k,
                   preferred_element_type=jnp.float32)         # (H*B, T, T)
    s = s + bias_ref[...]                                      # (1, T, T) bcast

    # Softmax, all f32, exact divide (free at this size; tight vs reference).
    m = jnp.max(s, axis=-1, keepdims=True)
    p = jnp.exp(s - m)
    l = jnp.sum(p, axis=-1, keepdims=True)
    p = p / l
    # TODO(synk): train-mode dropout on p would go here (pltpu.prng_*).

    o = jnp.einsum("nqk,nkd->nqd", p, v,
                   preferred_element_type=jnp.float32)         # (H*B, T, hs)

    # Output projection: one head-batched einsum + a leading-dim reduce over H
    # (equivalent to concat-over-heads @ Wp.T, without a lane-axis concat).
    oh = o.reshape(H, BT, hs)
    proj = jnp.einsum("hnd,hdc->hnc", oh, wp_ref[...],
                      preferred_element_type=jnp.float32)      # (H, B*T, C)
    out = jnp.sum(proj, axis=0) + bp_ref[...]                  # (B*T, C)
    o_ref[...] = out.astype(o_ref.dtype)


def multi_head_attention(x, params, *, num_heads=NUM_HEADS):
    """x: (B, T, C). params: output of prepare_mha_params (precomputed once)."""
    wqkv, wp_h, bp2, bias = params
    Bn, T, C = x.shape
    x2d = x.reshape(Bn * T, C)   # flatten batch*seq; kernel I/O stays 2-D

    kernel = functools.partial(_mha_kernel, batch=Bn, seq_len=T,
                               num_heads=num_heads)
    vmem = pl.BlockSpec(memory_space=pltpu.MemorySpace.VMEM)
    out2d = pl.pallas_call(
        kernel,
        out_shape=jax.ShapeDtypeStruct((Bn * T, C), x.dtype),
        in_specs=[vmem] * 5,
        out_specs=vmem,
    )(x2d, wqkv, wp_h, bp2, bias)
    return out2d.reshape(Bn, T, C)


def reference(x, wq, wk, wv, wp, bp):
    # Pure-JAX reference mirroring the PyTorch forward.
    Bn, T, C = x.shape
    q = x @ wq.T
    k = x @ wk.T
    v = x @ wv.T
    qh = q.reshape(Bn, T, NUM_HEADS, HEAD_SIZE).transpose(0, 2, 1, 3)
    kh = k.reshape(Bn, T, NUM_HEADS, HEAD_SIZE).transpose(0, 2, 1, 3)
    vh = v.reshape(Bn, T, NUM_HEADS, HEAD_SIZE).transpose(0, 2, 1, 3)
    s = jnp.einsum("bhqd,bhkd->bhqk", qh, kh) * (C ** -0.5)
    mask = jnp.tril(jnp.ones((T, T), dtype=bool))
    s = jnp.where(mask, s, -jnp.inf)
    p = jax.nn.softmax(s, axis=-1)
    o = jnp.einsum("bhqk,bhkd->bhqd", p, vh)
    o = o.transpose(0, 2, 1, 3).reshape(Bn, T, C)
    return o @ wp.T + bp


if __name__ == "__main__":
    key = jax.random.PRNGKey(0)
    kx, kq, kk, kv, kp, kb = jax.random.split(key, 6)

    x = jax.random.normal(kx, (B, SEQ_LEN, N_EMBED), dtype=jnp.float32)
    # Per-head Linear(n_embed, head_size, bias=False) weights, stacked along
    # the output dim so head h occupies rows [h*hs, (h+1)*hs) -> (C, C).
    wq = jax.random.normal(kq, (N_EMBED, N_EMBED), dtype=jnp.float32) * 0.1
    wk = jax.random.normal(kk, (N_EMBED, N_EMBED), dtype=jnp.float32) * 0.1
    wv = jax.random.normal(kv, (N_EMBED, N_EMBED), dtype=jnp.float32) * 0.1
    wp = jax.random.normal(kp, (N_EMBED, N_EMBED), dtype=jnp.float32) * 0.1
    bp = jax.random.normal(kb, (N_EMBED,), dtype=jnp.float32) * 0.1

    # One-time per-layer prep (fused/transposed weights, folded scale, bias).
    params = prepare_mha_params(wq, wk, wv, wp, bp)

    out = multi_head_attention(x, params)
    out = jax.block_until_ready(out)

    ref = reference(x, wq, wk, wv, wp, bp)
    assert out.shape == (B, SEQ_LEN, N_EMBED)
    assert jnp.allclose(out, ref, atol=1e-4, rtol=1e-4), "mismatch vs JAX reference"

    print("KERNEL_OK")
</pallas_src>

<mosaic_0001>
module attributes {stable_mosaic.version = 11 : i64} {
  func.func @_mha_kernel(%arg0: memref<16x32xf32, #tpu.memory_space<vmem>>, %arg1: memref<4x32x24xf32, #tpu.memory_space<vmem>>, %arg2: memref<4x8x32xf32, #tpu.memory_space<vmem>>, %arg3: memref<1x32xf32, #tpu.memory_space<vmem>>, %arg4: memref<1x8x8xf32, #tpu.memory_space<vmem>>, %arg5: memref<16x32xf32, #tpu.memory_space<vmem>>) attributes {dimension_semantics = [], scalar_prefetch = 0 : i64, scratch_operands = 0 : i64, tpu.core_type = #tpu.core_type<tc>} {
    %c0 = arith.constant 0 : index
    %c0_0 = arith.constant 0 : index
    %0 = vector.load %arg0[%c0, %c0_0] : memref<16x32xf32, #tpu.memory_space<vmem>>, vector<16x32xf32>
    %1 = vector.shape_cast %0 : vector<16x32xf32> to vector<1x16x32xf32>
    %2 = vector.shape_cast %1 : vector<1x16x32xf32> to vector<1x16x32xf32>
    %3 = vector.broadcast %2 : vector<1x16x32xf32> to vector<4x16x32xf32>
    %c0_1 = arith.constant 0 : index
    %c0_2 = arith.constant 0 : index
    %c0_3 = arith.constant 0 : index
    %4 = vector.load %arg1[%c0_1, %c0_2, %c0_3] : memref<4x32x24xf32, #tpu.memory_space<vmem>>, vector<4x32x24xf32>
    "tpu.trace_start"() <{level = 10 : i32, message = "hnc,hcd->hnd"}> : () -> ()
    %cst = arith.constant dense<0.000000e+00> : vector<4x16x24xf32>
    %5 = tpu.matmul %3, %4, %cst {dimension_numbers = #tpu.dot_dimension_numbers<[2], [1], [1], [2], [0, 0, 0, 1, 1, 2], [0], [0]>} : vector<4x16x32xf32>, vector<4x32x24xf32>, vector<4x16x24xf32> -> vector<4x16x24xf32>
    "tpu.trace_stop"() : () -> ()
    %6 = vector.extract_strided_slice %5 {offsets = [0, 0, 0], sizes = [4, 16, 8], strides = [1, 1, 1]} : vector<4x16x24xf32> to vector<4x16x8xf32>
    %7 = vector.shape_cast %6 : vector<4x16x8xf32> to vector<8x8x8xf32>
    %8 = vector.extract_strided_slice %5 {offsets = [0, 0, 8], sizes = [4, 16, 8], strides = [1, 1, 1]} : vector<4x16x24xf32> to vector<4x16x8xf32>
    %9 = vector.shape_cast %8 : vector<4x16x8xf32> to vector<8x8x8xf32>
    %10 = vector.extract_strided_slice %5 {offsets = [0, 0, 16], sizes = [4, 16, 8], strides = [1, 1, 1]} : vector<4x16x24xf32> to vector<4x16x8xf32>
    %11 = vector.shape_cast %10 : vector<4x16x8xf32> to vector<8x8x8xf32>
    "tpu.trace_start"() <{level = 10 : i32, message = "nqd,nkd->nqk"}> : () -> ()
    %cst_4 = arith.constant dense<0.000000e+00> : vector<8x8x8xf32>
    %12 = tpu.matmul %7, %9, %cst_4 {dimension_numbers = #tpu.dot_dimension_numbers<[2], [2], [1], [1], [0, 0, 0, 1, 1, 1], [0], [0]>} : vector<8x8x8xf32>, vector<8x8x8xf32>, vector<8x8x8xf32> -> vector<8x8x8xf32>
    "tpu.trace_stop"() : () -> ()
    %c0_5 = arith.constant 0 : index
    %c0_6 = arith.constant 0 : index
    %c0_7 = arith.constant 0 : index
    %13 = vector.load %arg4[%c0_5, %c0_6, %c0_7] : memref<1x8x8xf32, #tpu.memory_space<vmem>>, vector<1x8x8xf32>
    %14 = vector.broadcast %13 : vector<1x8x8xf32> to vector<8x8x8xf32>
    %15 = arith.addf %12, %14 : vector<8x8x8xf32>
    %cst_8 = arith.constant dense<0xFF800000> : vector<8x8xf32>
    %16 = vector.multi_reduction <maximumf>, %15, %cst_8 [2] : vector<8x8x8xf32> to vector<8x8xf32>
    %17 = vector.shape_cast %16 : vector<8x8xf32> to vector<8x8x1xf32>
    %18 = vector.broadcast %17 : vector<8x8x1xf32> to vector<8x8x8xf32>
    %19 = arith.subf %15, %18 : vector<8x8x8xf32>
    %20 = math.exp %19 : vector<8x8x8xf32>
    %cst_9 = arith.constant dense<0.000000e+00> : vector<8x8xf32>
    %21 = vector.multi_reduction <add>, %20, %cst_9 [2] : vector<8x8x8xf32> to vector<8x8xf32>
    %22 = vector.shape_cast %21 : vector<8x8xf32> to vector<8x8x1xf32>
    %23 = vector.broadcast %22 : vector<8x8x1xf32> to vector<8x8x8xf32>
    %24 = arith.divf %20, %23 : vector<8x8x8xf32>
    "tpu.trace_start"() <{level = 10 : i32, message = "nqk,nkd->nqd"}> : () -> ()
    %cst_10 = arith.constant dense<0.000000e+00> : vector<8x8x8xf32>
    %25 = tpu.matmul %24, %11, %cst_10 {dimension_numbers = #tpu.dot_dimension_numbers<[2], [1], [1], [2], [0, 0, 0, 1, 1, 2], [0], [0]>} : vector<8x8x8xf32>, vector<8x8x8xf32>, vector<8x8x8xf32> -> vector<8x8x8xf32>
    "tpu.trace_stop"() : () -> ()
    %26 = vector.shape_cast %25 : vector<8x8x8xf32> to vector<4x16x8xf32>
    %c0_11 = arith.constant 0 : index
    %c0_12 = arith.constant 0 : index
    %c0_13 = arith.constant 0 : index
    %27 = vector.load %arg2[%c0_11, %c0_12, %c0_13] : memref<4x8x32xf32, #tpu.memory_space<vmem>>, vector<4x8x32xf32>
    "tpu.trace_start"() <{level = 10 : i32, message = "hnd,hdc->hnc"}> : () -> ()
    %cst_14 = arith.constant dense<0.000000e+00> : vector<4x16x32xf32>
    %28 = tpu.matmul %26, %27, %cst_14 {dimension_numbers = #tpu.dot_dimension_numbers<[2], [1], [1], [2], [0, 0, 0, 1, 1, 2], [0], [0]>} : vector<4x16x8xf32>, vector<4x8x32xf32>, vector<4x16x32xf32> -> vector<4x16x32xf32>
    "tpu.trace_stop"() : () -> ()
    %cst_15 = arith.constant dense<0.000000e+00> : vector<16x32xf32>
    %29 = vector.multi_reduction <add>, %28, %cst_15 [0] : vector<4x16x32xf32> to vector<16x32xf32>
    %c0_16 = arith.constant 0 : index
    %c0_17 = arith.constant 0 : index
    %30 = vector.load %arg3[%c0_16, %c0_17] : memref<1x32xf32, #tpu.memory_space<vmem>>, vector<1x32xf32>
    %31 = vector.broadcast %30 : vector<1x32xf32> to vector<16x32xf32>
    %32 = arith.addf %29, %31 : vector<16x32xf32>
    %c0_18 = arith.constant 0 : index
    %c0_19 = arith.constant 0 : index
    %33 = vector.load %arg5[%c0_18, %c0_19] : memref<16x32xf32, #tpu.memory_space<vmem>>, vector<16x32xf32>
    tpu.vector_store %arg5[%c0_18, %c0_19], %32 {strides = array<i32>} : memref<16x32xf32, #tpu.memory_space<vmem>>, vector<16x32xf32>,
    return
  }
}

</mosaic_0001>

<llo_original>
// kernel: tpu_custom_call.1
$region0: #{tpu_custom_call.1}
  #allocation0 [shape = 'u32[]', space=smem, size = 0x4, offset = 0x4, fixed_abs, tag = 'smem constant byte address 0x4 - core index']
  #allocation1 [shape = 'u32[72,128]{1,0:T(1,128)}', space=vmem, size = 0x9000, scoped, tag = 'internal scratch']
  %s0 = inlined_call_operand.vmem [shape: f32[16,32], index: 0, kind: input, shape index: {}]
  %s1 = inlined_call_operand.vmem [shape: f32[4,32,24], index: 1, kind: input, shape index: {}]
  %s2 = inlined_call_operand.vmem [shape: f32[4,8,32], index: 2, kind: input, shape index: {}]
  %s3 = inlined_call_operand.vmem [shape: f32[1,32], index: 3, kind: input, shape index: {}]
  %s4 = inlined_call_operand.vmem [shape: f32[1,8,8], index: 4, kind: input, shape index: {}]
  %s5 = inlined_call_operand.hbm [shape: f32[16,32], index: 5, kind: output, shape index: {}]
  %s6 = sld [smem:[#allocation0]]
  $region30: #{tpu_custom_call.1} parent=0
    _
  %s8 = ssub.s32 1, %s6
  %s9 = scalar_select 0, %s8, %s6
  $region1: #{tpu_custom_call.1} parent=0
    #allocation2 [shape = 'u8[8192]{0}', space=vmem, size = 0x2000, scoped, tag = 'output window, operand 0, single buffered']
    #allocation3 [shape = 's32[1]{0}', space=sflag, size = 0x4, scoped, tag = 'scoped memory for tpu_custom_call.1']
    %10 = vsyncpa [#allocation3], 0
    // Predicated region
    $region2: #{tpu_custom_call.1} parent=1 // pred_check
      _
    $region3: #{tpu_custom_call.1} parent=1 // pred_check_branch
      %12 = sbr.rel (0) target = $region5
    $region4: #{tpu_custom_call.1} parent=1 // pred_region
      _
    $region5: #{tpu_custom_call.1} parent=1 // pred_fallthru
      _
    // Predicated region
    $region6: #{tpu_custom_call.1} parent=1 // pred_check
      _
    $region7: #{tpu_custom_call.1} parent=1 // pred_check_branch
      %14 = sbr.rel (0) target = $region9
    $region8: #{tpu_custom_call.1} parent=1 // pred_region
      _
    $region9: #{tpu_custom_call.1} parent=1 // pred_fallthru
      _
    // Predicated region
    $region10: #{tpu_custom_call.1} parent=1 // pred_check
      _
    $region11: #{tpu_custom_call.1} parent=1 // pred_check_branch
      %16 = sbr.rel (0) target = $region13
    $region12: #{tpu_custom_call.1} parent=1 // pred_region
      _
    $region13: #{tpu_custom_call.1} parent=1 // pred_fallthru
      _
    // Predicated region
    $region14: #{tpu_custom_call.1} parent=1 // pred_check
      _
    $region15: #{tpu_custom_call.1} parent=1 // pred_check_branch
      %18 = sbr.rel (0) target = $region17
    $region16: #{tpu_custom_call.1} parent=1 // pred_region
      _
    $region17: #{tpu_custom_call.1} parent=1 // pred_fallthru
      _
    // Predicated region
    $region18: #{tpu_custom_call.1} parent=1 // pred_check
      _
    $region19: #{tpu_custom_call.1} parent=1 // pred_check_branch
      %20 = sbr.rel (0) target = $region21
    $region20: #{tpu_custom_call.1} parent=1 // pred_region
      _
    $region21: #{tpu_custom_call.1} parent=1 // pred_fallthru
      _
    %v21 = vld [vmem:[%s0] sm:$0xff]
    %v22 = vld [vmem:[%s0 + $0x8] sm:$0xff]
    %v23 = vld [vmem:[%s1] sm:$0xff]
    %v24 = vld [vmem:[%s1 + $0x8] sm:$0xff]
    %v25 = vld [vmem:[%s1 + $0x10] sm:$0xff]
    %v26 = vld [vmem:[%s1 + $0x18] sm:$0xff]
    %v27 = vld [vmem:[%s1 + $0x20] sm:$0xff]
    %v28 = vld [vmem:[%s1 + $0x28] sm:$0xff]
    %v29 = vld [vmem:[%s1 + $0x30] sm:$0xff]
    %v30 = vld [vmem:[%s1 + $0x38] sm:$0xff]
    %v31 = vld [vmem:[%s1 + $0x40] sm:$0xff]
    %v32 = vld [vmem:[%s1 + $0x48] sm:$0xff]
    %v33 = vld [vmem:[%s1 + $0x50] sm:$0xff]
    %v34 = vld [vmem:[%s1 + $0x58] sm:$0xff]
    %v35 = vld [vmem:[%s1 + $0x60] sm:$0xff]
    %v36 = vld [vmem:[%s1 + $0x68] sm:$0xff]
    %v37 = vld [vmem:[%s1 + $0x70] sm:$0xff]
    %v38 = vld [vmem:[%s1 + $0x78] sm:$0xff]
    %vm39 = vcmask 261120
    %v41 = vsel %vm39, %v21, 0
    %v44 = vsel %vm39, %v22, 0
    %46 = vmatpush.msra.mxu0 0.0
    %47 = vmatpush.msra.mxu0 0.0
    %48 = vmatpush.msra.mxu0 0.0
    %49 = vmatpush.msra.mxu0 0.0
    %50 = vmatpush.msra.mxu0 0.0
    %51 = vmatpush.msra.mxu0 0.0
    %52 = vmatpush.msra.mxu0 0.0
    %53 = vmatpush.msra.mxu0 0.0
    %54 = vmatpush.msra.mxu0 0.0
    %55 = vmatpush.msra.mxu0 0.0
    %56 = vmatpush.msra.mxu0 0.0
    %57 = vmatpush.msra.mxu0 0.0
    %58 = vmatpush.msra.mxu0 %v26
    %59 = vmatpush.msra.mxu0 %v25
    %60 = vmatpush.msra.mxu0 %v24
    %61 = vmatpush.msra.mxu0 %v23
    %62 = vmatmul.f32.gmra.mxu0 %v41
    %v63 = vpop.f32.mrf.mxu0
    %v64 = vadd.f32 0.0, %v63
    %65 = vmatmul.f32.gmra.mxu0 %v44
    %v66 = vpop.f32.mrf.mxu0
    %v67 = vadd.f32 0.0, %v66
    %68 = vdwg.mxu0
    %69 = vmatpush.msra.mxu0 0.0
    %70 = vmatpush.msra.mxu0 0.0
    %71 = vmatpush.msra.mxu0 0.0
    %72 = vmatpush.msra.mxu0 0.0
    %73 = vmatpush.msra.mxu0 0.0
    %74 = vmatpush.msra.mxu0 0.0
    %75 = vmatpush.msra.mxu0 0.0
    %76 = vmatpush.msra.mxu0 0.0
    %77 = vmatpush.msra.mxu0 0.0
    %78 = vmatpush.msra.mxu0 0.0
    %79 = vmatpush.msra.mxu0 0.0
    %80 = vmatpush.msra.mxu0 0.0
    %81 = vmatpush.msra.mxu0 %v30
    %82 = vmatpush.msra.mxu0 %v29
    %83 = vmatpush.msra.mxu0 %v28
    %84 = vmatpush.msra.mxu0 %v27
    %85 = vmatmul.f32.gmra.mxu0 %v41
    %v86 = vpop.f32.mrf.mxu0
    %v87 = vadd.f32 0.0, %v86
    %88 = vmatmul.f32.gmra.mxu0 %v44
    %v89 = vpop.f32.mrf.mxu0
    %v90 = vadd.f32 0.0, %v89
    %91 = vdwg.mxu0
    %92 = vmatpush.msra.mxu0 0.0
    %93 = vmatpush.msra.mxu0 0.0
    %94 = vmatpush.msra.mxu0 0.0
    %95 = vmatpush.msra.mxu0 0.0
    %96 = vmatpush.msra.mxu0 0.0
    %97 = vmatpush.msra.mxu0 0.0
    %98 = vmatpush.msra.mxu0 0.0
    %99 = vmatpush.msra.mxu0 0.0
    %100 = vmatpush.msra.mxu0 0.0
    %101 = vmatpush.msra.mxu0 0.0
    %102 = vmatpush.msra.mxu0 0.0
    %103 = vmatpush.msra.mxu0 0.0
    %104 = vmatpush.msra.mxu0 %v34
    %105 = vmatpush.msra.mxu0 %v33
    %106 = vmatpush.msra.mxu0 %v32
    %107 = vmatpush.msra.mxu0 %v31
    %108 = vmatmul.f32.gmra.mxu0 %v41
    %v109 = vpop.f32.mrf.mxu0
    %v110 = vadd.f32 0.0, %v109
    %111 = vmatmul.f32.gmra.mxu0 %v44
    %v112 = vpop.f32.mrf.mxu0
    %v113 = vadd.f32 0.0, %v112
    %114 = vdwg.mxu0
    %115 = vmatpush.msra.mxu0 0.0
    %116 = vmatpush.msra.mxu0 0.0
    %117 = vmatpush.msra.mxu0 0.0
    %118 = vmatpush.msra.mxu0 0.0
    %119 = vmatpush.msra.mxu0 0.0
    %120 = vmatpush.msra.mxu0 0.0
    %121 = vmatpush.msra.mxu0 0.0
    %122 = vmatpush.msra.mxu0 0.0
    %123 = vmatpush.msra.mxu0 0.0
    %124 = vmatpush.msra.mxu0 0.0
    %125 = vmatpush.msra.mxu0 0.0
    %126 = vmatpush.msra.mxu0 0.0
    %127 = vmatpush.msra.mxu0 %v38
    %128 = vmatpush.msra.mxu0 %v37
    %129 = vmatpush.msra.mxu0 %v36
    %130 = vmatpush.msra.mxu0 %v35
    %131 = vmatmul.f32.gmra.mxu0 %v41
    %v132 = vpop.f32.mrf.mxu0
    %v133 = vadd.f32 0.0, %v132
    %134 = vmatmul.f32.gmra.mxu0 %v44
    %v135 = vpop.f32.mrf.mxu0
    %v136 = vadd.f32 0.0, %v135
    %137 = vdwg.mxu0
    %v138 = vld [vmem:[%s4] sm:$0xff]
    %140 = vrot.lane.b32.xlu0 %v64, 120
    %v141 = vpop.permute.xlu0 %140
    %vm142 = vcmask 64512
    %v143 = vsel %vm142, %v64, 0
    %v145 = vsel %vm142, %v141, 0
    %147 = vmatpush.xpose.msra.mxu0 0.0
    %148 = vmatpush.xpose.msra.mxu0 0.0
    %149 = vmatpush.xpose.msra.mxu0 0.0
    %150 = vmatpush.xpose.msra.mxu0 0.0
    %151 = vmatpush.xpose.msra.mxu0 0.0
    %152 = vmatpush.xpose.msra.mxu0 0.0
    %153 = vmatpush.xpose.msra.mxu0 0.0
    %154 = vmatpush.xpose.msra.mxu0 0.0
    %155 = vmatpush.xpose.msra.mxu0 0.0
    %156 = vmatpush.xpose.msra.mxu0 0.0
    %157 = vmatpush.xpose.msra.mxu0 0.0
    %158 = vmatpush.xpose.msra.mxu0 0.0
    %159 = vmatpush.xpose.msra.mxu0 0.0
    %160 = vmatpush.xpose.msra.mxu0 0.0
    %161 = vmatpush.xpose.msra.mxu0 0.0
    %162 = vmatpush.xpose.msra.mxu0 %v145
    %163 = vmatmul.f32.gmra.mxu0 %v143
    %v164 = vpop.f32.mrf.mxu0
    %v165 = vadd.f32 %v138, %v164
    %166 = vdwg.mxu0
    %168 = vrot.lane.b32.xlu0 %v67, 120
    %v169 = vpop.permute.xlu0 %168
    %v170 = vsel %vm142, %v67, 0
    %v172 = vsel %vm142, %v169, 0
    %174 = vmatpush.xpose.msra.mxu0 0.0
    %175 = vmatpush.xpose.msra.mxu0 0.0
    %176 = vmatpush.xpose.msra.mxu0 0.0
    %177 = vmatpush.xpose.msra.mxu0 0.0
    %178 = vmatpush.xpose.msra.mxu0 0.0
    %179 = vmatpush.xpose.msra.mxu0 0.0
    %180 = vmatpush.xpose.msra.mxu0 0.0
    %181 = vmatpush.xpose.msra.mxu0 0.0
    %182 = vmatpush.xpose.msra.mxu0 0.0
    %183 = vmatpush.xpose.msra.mxu0 0.0
    %184 = vmatpush.xpose.msra.mxu0 0.0
    %185 = vmatpush.xpose.msra.mxu0 0.0
    %186 = vmatpush.xpose.msra.mxu0 0.0
    %187 = vmatpush.xpose.msra.mxu0 0.0
    %188 = vmatpush.xpose.msra.mxu0 0.0
    %189 = vmatpush.xpose.msra.mxu0 %v172
    %190 = vmatmul.f32.gmra.mxu0 %v170
    %v191 = vpop.f32.mrf.mxu0
    %v192 = vadd.f32 %v138, %v191
    %193 = vdwg.mxu0
    %195 = vrot.lane.b32.xlu0 %v87, 120
    %v196 = vpop.permute.xlu0 %195
    %v197 = vsel %vm142, %v87, 0
    %v199 = vsel %vm142, %v196, 0
    %201 = vmatpush.xpose.msra.mxu0 0.0
    %202 = vmatpush.xpose.msra.mxu0 0.0
    %203 = vmatpush.xpose.msra.mxu0 0.0
    %204 = vmatpush.xpose.msra.mxu0 0.0
    %205 = vmatpush.xpose.msra.mxu0 0.0
    %206 = vmatpush.xpose.msra.mxu0 0.0
    %207 = vmatpush.xpose.msra.mxu0 0.0
    %208 = vmatpush.xpose.msra.mxu0 0.0
    %209 = vmatpush.xpose.msra.mxu0 0.0
    %210 = vmatpush.xpose.msra.mxu0 0.0
    %211 = vmatpush.xpose.msra.mxu0 0.0
    %212 = vmatpush.xpose.msra.mxu0 0.0
    %213 = vmatpush.xpose.msra.mxu0 0.0
    %214 = vmatpush.xpose.msra.mxu0 0.0
    %215 = vmatpush.xpose.msra.mxu0 0.0
    %216 = vmatpush.xpose.msra.mxu0 %v199
    %217 = vmatmul.f32.gmra.mxu0 %v197
    %v218 = vpop.f32.mrf.mxu0
    %v219 = vadd.f32 %v138, %v218
    %220 = vdwg.mxu0
    %222 = vrot.lane.b32.xlu0 %v90, 120
    %v223 = vpop.permute.xlu0 %222
    %v224 = vsel %vm142, %v90, 0
    %v226 = vsel %vm142, %v223, 0
    %228 = vmatpush.xpose.msra.mxu0 0.0
    %229 = vmatpush.xpose.msra.mxu0 0.0
    %230 = vmatpush.xpose.msra.mxu0 0.0
    %231 = vmatpush.xpose.msra.mxu0 0.0
    %232 = vmatpush.xpose.msra.mxu0 0.0
    %233 = vmatpush.xpose.msra.mxu0 0.0
    %234 = vmatpush.xpose.msra.mxu0 0.0
    %235 = vmatpush.xpose.msra.mxu0 0.0
    %236 = vmatpush.xpose.msra.mxu0 0.0
    %237 = vmatpush.xpose.msra.mxu0 0.0
    %238 = vmatpush.xpose.msra.mxu0 0.0
    %239 = vmatpush.xpose.msra.mxu0 0.0
    %240 = vmatpush.xpose.msra.mxu0 0.0
    %241 = vmatpush.xpose.msra.mxu0 0.0
    %242 = vmatpush.xpose.msra.mxu0 0.0
    %243 = vmatpush.xpose.msra.mxu0 %v226
    %244 = vmatmul.f32.gmra.mxu0 %v224
    %v245 = vpop.f32.mrf.mxu0
    %v246 = vadd.f32 %v138, %v245
    %247 = vdwg.mxu0
    %249 = vrot.lane.b32.xlu0 %v110, 120
    %v250 = vpop.permute.xlu0 %249
    %v251 = vsel %vm142, %v110, 0
    %v253 = vsel %vm142, %v250, 0
    %255 = vmatpush.xpose.msra.mxu0 0.0
    %256 = vmatpush.xpose.msra.mxu0 0.0
    %257 = vmatpush.xpose.msra.mxu0 0.0
    %258 = vmatpush.xpose.msra.mxu0 0.0
    %259 = vmatpush.xpose.msra.mxu0 0.0
    %260 = vmatpush.xpose.msra.mxu0 0.0
    %261 = vmatpush.xpose.msra.mxu0 0.0
    %262 = vmatpush.xpose.msra.mxu0 0.0
    %263 = vmatpush.xpose.msra.mxu0 0.0
    %264 = vmatpush.xpose.msra.mxu0 0.0
    %265 = vmatpush.xpose.msra.mxu0 0.0
    %266 = vmatpush.xpose.msra.mxu0 0.0
    %267 = vmatpush.xpose.msra.mxu0 0.0
    %268 = vmatpush.xpose.msra.mxu0 0.0
    %269 = vmatpush.xpose.msra.mxu0 0.0
    %270 = vmatpush.xpose.msra.mxu0 %v253
    %271 = vmatmul.f32.gmra.mxu0 %v251
    %v272 = vpop.f32.mrf.mxu0
    %v273 = vadd.f32 %v138, %v272
    %274 = vdwg.mxu0
    %276 = vrot.lane.b32.xlu0 %v113, 120
    %v277 = vpop.permute.xlu0 %276
    %v278 = vsel %vm142, %v113, 0
    %v280 = vsel %vm142, %v277, 0
    %282 = vmatpush.xpose.msra.mxu0 0.0
    %283 = vmatpush.xpose.msra.mxu0 0.0
    %284 = vmatpush.xpose.msra.mxu0 0.0
    %285 = vmatpush.xpose.msra.mxu0 0.0
    %286 = vmatpush.xpose.msra.mxu0 0.0
    %287 = vmatpush.xpose.msra.mxu0 0.0
    %288 = vmatpush.xpose.msra.mxu0 0.0
    %289 = vmatpush.xpose.msra.mxu0 0.0
    %290 = vmatpush.xpose.msra.mxu0 0.0
    %291 = vmatpush.xpose.msra.mxu0 0.0
    %292 = vmatpush.xpose.msra.mxu0 0.0
    %293 = vmatpush.xpose.msra.mxu0 0.0
    %294 = vmatpush.xpose.msra.mxu0 0.0
    %295 = vmatpush.xpose.msra.mxu0 0.0
    %296 = vmatpush.xpose.msra.mxu0 0.0
    %297 = vmatpush.xpose.msra.mxu0 %v280
    %298 = vmatmul.f32.gmra.mxu0 %v278
    %v299 = vpop.f32.mrf.mxu0
    %v300 = vadd.f32 %v138, %v299
    %301 = vdwg.mxu0
    %303 = vrot.lane.b32.xlu0 %v133, 120
    %v304 = vpop.permute.xlu0 %303
    %v305 = vsel %vm142, %v133, 0
    %v307 = vsel %vm142, %v304, 0
    %309 = vmatpush.xpose.msra.mxu0 0.0
    %310 = vmatpush.xpose.msra.mxu0 0.0
    %311 = vmatpush.xpose.msra.mxu0 0.0
    %312 = vmatpush.xpose.msra.mxu0 0.0
    %313 = vmatpush.xpose.msra.mxu0 0.0
    %314 = vmatpush.xpose.msra.mxu0 0.0
    %315 = vmatpush.xpose.msra.mxu0 0.0
    %316 = vmatpush.xpose.msra.mxu0 0.0
    %317 = vmatpush.xpose.msra.mxu0 0.0
    %318 = vmatpush.xpose.msra.mxu0 0.0
    %319 = vmatpush.xpose.msra.mxu0 0.0
    %320 = vmatpush.xpose.msra.mxu0 0.0
    %321 = vmatpush.xpose.msra.mxu0 0.0
    %322 = vmatpush.xpose.msra.mxu0 0.0
    %323 = vmatpush.xpose.msra.mxu0 0.0
    %324 = vmatpush.xpose.msra.mxu0 %v307
    %325 = vmatmul.f32.gmra.mxu0 %v305
    %v326 = vpop.f32.mrf.mxu0
    %v327 = vadd.f32 %v138, %v326
    %328 = vdwg.mxu0
    %330 = vrot.lane.b32.xlu0 %v136, 120
    %v331 = vpop.permute.xlu0 %330
    %v332 = vsel %vm142, %v136, 0
    %v334 = vsel %vm142, %v331, 0
    %336 = vmatpush.xpose.msra.mxu0 0.0
    %337 = vmatpush.xpose.msra.mxu0 0.0
    %338 = vmatpush.xpose.msra.mxu0 0.0
    %339 = vmatpush.xpose.msra.mxu0 0.0
    %340 = vmatpush.xpose.msra.mxu0 0.0
    %341 = vmatpush.xpose.msra.mxu0 0.0
    %342 = vmatpush.xpose.msra.mxu0 0.0
    %343 = vmatpush.xpose.msra.mxu0 0.0
    %344 = vmatpush.xpose.msra.mxu0 0.0
    %345 = vmatpush.xpose.msra.mxu0 0.0
    %346 = vmatpush.xpose.msra.mxu0 0.0
    %347 = vmatpush.xpose.msra.mxu0 0.0
    %348 = vmatpush.xpose.msra.mxu0 0.0
    %349 = vmatpush.xpose.msra.mxu0 0.0
    %350 = vmatpush.xpose.msra.mxu0 0.0
    %351 = vmatpush.xpose.msra.mxu0 %v334
    %352 = vmatmul.f32.gmra.mxu0 %v332
    %v353 = vpop.f32.mrf.mxu0
    %v354 = vadd.f32 %v138, %v353
    %355 = vdwg.mxu0
    %v356 = vsel %vm142, %v165, -inf
    %357 = vmax.xlane.f32.xlu0 %v356
    %v358 = vpop.xlane.xlu0 %357
    %v359 = vsel %vm142, %v192, -inf
    %360 = vmax.xlane.f32.xlu0 %v359
    %v361 = vpop.xlane.xlu0 %360
    %v362 = vsel %vm142, %v219, -inf
    %363 = vmax.xlane.f32.xlu0 %v362
    %v364 = vpop.xlane.xlu0 %363
    %v365 = vsel %vm142, %v246, -inf
    %366 = vmax.xlane.f32.xlu0 %v365
    %v367 = vpop.xlane.xlu0 %366
    %v368 = vsel %vm142, %v273, -inf
    %369 = vmax.xlane.f32.xlu0 %v368
    %v370 = vpop.xlane.xlu0 %369
    %v371 = vsel %vm142, %v300, -inf
    %372 = vmax.xlane.f32.xlu0 %v371
    %v373 = vpop.xlane.xlu0 %372
    %v374 = vsel %vm142, %v327, -inf
    %375 = vmax.xlane.f32.xlu0 %v374
    %v376 = vpop.xlane.xlu0 %375
    %v377 = vsel %vm142, %v354, -inf
    %378 = vmax.xlane.f32.xlu0 %v377
    %v379 = vpop.xlane.xlu0 %378
    %v380 = vsub.f32 %v165, %v358
    %v381 = vsub.f32 %v192, %v361
    %v382 = vsub.f32 %v219, %v364
    %v383 = vsub.f32 %v246, %v367
    %v384 = vsub.f32 %v273, %v370
    %v385 = vsub.f32 %v300, %v373
    %v386 = vsub.f32 %v327, %v376
    %v387 = vsub.f32 %v354, %v379
    %v388 = vmul.f32 %v380, 1.442695
    %v389 = vpow.pop %v388
    %v390 = vmul.f32 %v381, 1.442695
    %v391 = vpow.pop %v390
    %v392 = vmul.f32 %v382, 1.442695
    %v393 = vpow.pop %v392
    %v394 = vmul.f32 %v383, 1.442695
    %v395 = vpow.pop %v394
    %v396 = vmul.f32 %v384, 1.442695
    %v397 = vpow.pop %v396
    %v398 = vmul.f32 %v385, 1.442695
    %v399 = vpow.pop %v398
    %v400 = vmul.f32 %v386, 1.442695
    %v401 = vpow.pop %v400
    %v402 = vmul.f32 %v387, 1.442695
    %v403 = vpow.pop %v402
    %v404 = vsel %vm142, %v389, 0.0
    %405 = vadd.xlane.f32.xlu0 %v404
    %v406 = vpop.xlane.xlu0 %405
    %v407 = vsel %vm142, %v391, 0.0
    %408 = vadd.xlane.f32.xlu0 %v407
    %v409 = vpop.xlane.xlu0 %408
    %v410 = vsel %vm142, %v393, 0.0
    %411 = vadd.xlane.f32.xlu0 %v410
    %v412 = vpop.xlane.xlu0 %411
    %v413 = vsel %vm142, %v395, 0.0
    %414 = vadd.xlane.f32.xlu0 %v413
    %v415 = vpop.xlane.xlu0 %414
    %v416 = vsel %vm142, %v397, 0.0
    %417 = vadd.xlane.f32.xlu0 %v416
    %v418 = vpop.xlane.xlu0 %417
    %v419 = vsel %vm142, %v399, 0.0
    %420 = vadd.xlane.f32.xlu0 %v419
    %v421 = vpop.xlane.xlu0 %420
    %v422 = vsel %vm142, %v401, 0.0
    %423 = vadd.xlane.f32.xlu0 %v422
    %v424 = vpop.xlane.xlu0 %423
    %v425 = vsel %vm142, %v403, 0.0
    %426 = vadd.xlane.f32.xlu0 %v425
    %v427 = vpop.xlane.xlu0 %426
    %v428 = vrcp.pop %v406
    %v429 = vmul.f32 %v406, %v428
    %v430 = vsub.f32 1.0, %v429
    %v431 = vmul.f32 %v428, %v430
    %v432 = vadd.f32 %v428, %v431
    %vm433 = vweird.f32 %v406
    %vm434 = vweird.f32 %v428
    %vm435 = vmor %vm433, %vm434
    %v436 = vsel %vm435, %v428, %v432
    %v437 = vand.u32 2147483647, %v406
    %vm438 = vcmp.eq.f32.partialorder %v437, 8.507059e+37
    %v439 = vand.u32 %v406, 2147483648
    %v440 = vor.u32 1.1754944e-38, %v439
    %v441 = vsel %vm438, %v440, %v436
    %v442 = vmul.f32 %v389, %v441
    %v443 = vrcp.pop %v409
    %v444 = vmul.f32 %v409, %v443
    %v445 = vsub.f32 1.0, %v444
    %v446 = vmul.f32 %v443, %v445
    %v447 = vadd.f32 %v443, %v446
    %vm448 = vweird.f32 %v409
    %vm449 = vweird.f32 %v443
    %vm450 = vmor %vm448, %vm449
    %v451 = vsel %vm450, %v443, %v447
    %v452 = vand.u32 2147483647, %v409
    %vm453 = vcmp.eq.f32.partialorder %v452, 8.507059e+37
    %v454 = vand.u32 %v409, 2147483648
    %v455 = vor.u32 1.1754944e-38, %v454
    %v456 = vsel %vm453, %v455, %v451
    %v457 = vmul.f32 %v391, %v456
    %v458 = vrcp.pop %v412
    %v459 = vmul.f32 %v412, %v458
    %v460 = vsub.f32 1.0, %v459
    %v461 = vmul.f32 %v458, %v460
    %v462 = vadd.f32 %v458, %v461
    %vm463 = vweird.f32 %v412
    %vm464 = vweird.f32 %v458
    %vm465 = vmor %vm463, %vm464
    %v466 = vsel %vm465, %v458, %v462
    %v467 = vand.u32 2147483647, %v412
    %vm468 = vcmp.eq.f32.partialorder %v467, 8.507059e+37
    %v469 = vand.u32 %v412, 2147483648
    %v470 = vor.u32 1.1754944e-38, %v469
    %v471 = vsel %vm468, %v470, %v466
    %v472 = vmul.f32 %v393, %v471
    %v473 = vrcp.pop %v415
    %v474 = vmul.f32 %v415, %v473
    %v475 = vsub.f32 1.0, %v474
    %v476 = vmul.f32 %v473, %v475
    %v477 = vadd.f32 %v473, %v476
    %vm478 = vweird.f32 %v415
    %vm479 = vweird.f32 %v473
    %vm480 = vmor %vm478, %vm479
    %v481 = vsel %vm480, %v473, %v477
    %v482 = vand.u32 2147483647, %v415
    %vm483 = vcmp.eq.f32.partialorder %v482, 8.507059e+37
    %v484 = vand.u32 %v415, 2147483648
    %v485 = vor.u32 1.1754944e-38, %v484
    %v486 = vsel %vm483, %v485, %v481
    %v487 = vmul.f32 %v395, %v486
    %v488 = vrcp.pop %v418
    %v489 = vmul.f32 %v418, %v488
    %v490 = vsub.f32 1.0, %v489
    %v491 = vmul.f32 %v488, %v490
    %v492 = vadd.f32 %v488, %v491
    %vm493 = vweird.f32 %v418
    %vm494 = vweird.f32 %v488
    %vm495 = vmor %vm493, %vm494
    %v496 = vsel %vm495, %v488, %v492
    %v497 = vand.u32 2147483647, %v418
    %vm498 = vcmp.eq.f32.partialorder %v497, 8.507059e+37
    %v499 = vand.u32 %v418, 2147483648
    %v500 = vor.u32 1.1754944e-38, %v499
    %v501 = vsel %vm498, %v500, %v496
    %v502 = vmul.f32 %v397, %v501
    %v503 = vrcp.pop %v421
    %v504 = vmul.f32 %v421, %v503
    %v505 = vsub.f32 1.0, %v504
    %v506 = vmul.f32 %v503, %v505
    %v507 = vadd.f32 %v503, %v506
    %vm508 = vweird.f32 %v421
    %vm509 = vweird.f32 %v503
    %vm510 = vmor %vm508, %vm509
    %v511 = vsel %vm510, %v503, %v507
    %v512 = vand.u32 2147483647, %v421
    %vm513 = vcmp.eq.f32.partialorder %v512, 8.507059e+37
    %v514 = vand.u32 %v421, 2147483648
    %v515 = vor.u32 1.1754944e-38, %v514
    %v516 = vsel %vm513, %v515, %v511
    %v517 = vmul.f32 %v399, %v516
    %v518 = vrcp.pop %v424
    %v519 = vmul.f32 %v424, %v518
    %v520 = vsub.f32 1.0, %v519
    %v521 = vmul.f32 %v518, %v520
    %v522 = vadd.f32 %v518, %v521
    %vm523 = vweird.f32 %v424
    %vm524 = vweird.f32 %v518
    %vm525 = vmor %vm523, %vm524
    %v526 = vsel %vm525, %v518, %v522
    %v527 = vand.u32 2147483647, %v424
    %vm528 = vcmp.eq.f32.partialorder %v527, 8.507059e+37
    %v529 = vand.u32 %v424, 2147483648
    %v530 = vor.u32 1.1754944e-38, %v529
    %v531 = vsel %vm528, %v530, %v526
    %v532 = vmul.f32 %v401, %v531
    %v533 = vrcp.pop %v427
    %v534 = vmul.f32 %v427, %v533
    %v535 = vsub.f32 1.0, %v534
    %v536 = vmul.f32 %v533, %v535
    %v537 = vadd.f32 %v533, %v536
    %vm538 = vweird.f32 %v427
    %vm539 = vweird.f32 %v533
    %vm540 = vmor %vm538, %vm539
    %v541 = vsel %vm540, %v533, %v537
    %v542 = vand.u32 2147483647, %v427
    %vm543 = vcmp.eq.f32.partialorder %v542, 8.507059e+37
    %v544 = vand.u32 %v427, 2147483648
    %v545 = vor.u32 1.1754944e-38, %v544
    %v546 = vsel %vm543, %v545, %v541
    %v547 = vmul.f32 %v403, %v546
    %548 = vrot.lane.b32.xlu0 %v64, 112
    %v549 = vpop.permute.xlu0 %548
    %v552 = vsel %vm142, %v442, 0
    %554 = vmatpush.msra.mxu0 0.0
    %555 = vmatpush.msra.mxu0 0.0
    %556 = vmatpush.msra.mxu0 0.0
    %557 = vmatpush.msra.mxu0 0.0
    %558 = vmatpush.msra.mxu0 0.0
    %559 = vmatpush.msra.mxu0 0.0
    %560 = vmatpush.msra.mxu0 0.0
    %561 = vmatpush.msra.mxu0 0.0
    %562 = vmatpush.msra.mxu0 0.0
    %563 = vmatpush.msra.mxu0 0.0
    %564 = vmatpush.msra.mxu0 0.0
    %565 = vmatpush.msra.mxu0 0.0
    %566 = vmatpush.msra.mxu0 0.0
    %567 = vmatpush.msra.mxu0 0.0
    %568 = vmatpush.msra.mxu0 0.0
    %569 = vmatpush.msra.mxu0 %v549
    %570 = vmatmul.f32.gmra.mxu0 %v552
    %v571 = vpop.f32.mrf.mxu0
    %v572 = vadd.f32 0.0, %v571
    %573 = vdwg.mxu0
    %574 = vrot.lane.b32.xlu0 %v67, 112
    %v575 = vpop.permute.xlu0 %574
    %v578 = vsel %vm142, %v457, 0
    %580 = vmatpush.msra.mxu0 0.0
    %581 = vmatpush.msra.mxu0 0.0
    %582 = vmatpush.msra.mxu0 0.0
    %583 = vmatpush.msra.mxu0 0.0
    %584 = vmatpush.msra.mxu0 0.0
    %585 = vmatpush.msra.mxu0 0.0
    %586 = vmatpush.msra.mxu0 0.0
    %587 = vmatpush.msra.mxu0 0.0
    %588 = vmatpush.msra.mxu0 0.0
    %589 = vmatpush.msra.mxu0 0.0
    %590 = vmatpush.msra.mxu0 0.0
    %591 = vmatpush.msra.mxu0 0.0
    %592 = vmatpush.msra.mxu0 0.0
    %593 = vmatpush.msra.mxu0 0.0
    %594 = vmatpush.msra.mxu0 0.0
    %595 = vmatpush.msra.mxu0 %v575
    %596 = vmatmul.f32.gmra.mxu0 %v578
    %v597 = vpop.f32.mrf.mxu0
    %v598 = vadd.f32 0.0, %v597
    %599 = vdwg.mxu0
    %600 = vrot.lane.b32.xlu0 %v87, 112
    %v601 = vpop.permute.xlu0 %600
    %v604 = vsel %vm142, %v472, 0
    %606 = vmatpush.msra.mxu0 0.0
    %607 = vmatpush.msra.mxu0 0.0
    %608 = vmatpush.msra.mxu0 0.0
    %609 = vmatpush.msra.mxu0 0.0
    %610 = vmatpush.msra.mxu0 0.0
    %611 = vmatpush.msra.mxu0 0.0
    %612 = vmatpush.msra.mxu0 0.0
    %613 = vmatpush.msra.mxu0 0.0
    %614 = vmatpush.msra.mxu0 0.0
    %615 = vmatpush.msra.mxu0 0.0
    %616 = vmatpush.msra.mxu0 0.0
    %617 = vmatpush.msra.mxu0 0.0
    %618 = vmatpush.msra.mxu0 0.0
    %619 = vmatpush.msra.mxu0 0.0
    %620 = vmatpush.msra.mxu0 0.0
    %621 = vmatpush.msra.mxu0 %v601
    %622 = vmatmul.f32.gmra.mxu0 %v604
    %v623 = vpop.f32.mrf.mxu0
    %v624 = vadd.f32 0.0, %v623
    %625 = vdwg.mxu0
    %626 = vrot.lane.b32.xlu0 %v90, 112
    %v627 = vpop.permute.xlu0 %626
    %v630 = vsel %vm142, %v487, 0
    %632 = vmatpush.msra.mxu0 0.0
    %633 = vmatpush.msra.mxu0 0.0
    %634 = vmatpush.msra.mxu0 0.0
    %635 = vmatpush.msra.mxu0 0.0
    %636 = vmatpush.msra.mxu0 0.0
    %637 = vmatpush.msra.mxu0 0.0
    %638 = vmatpush.msra.mxu0 0.0
    %639 = vmatpush.msra.mxu0 0.0
    %640 = vmatpush.msra.mxu0 0.0
    %641 = vmatpush.msra.mxu0 0.0
    %642 = vmatpush.msra.mxu0 0.0
    %643 = vmatpush.msra.mxu0 0.0
    %644 = vmatpush.msra.mxu0 0.0
    %645 = vmatpush.msra.mxu0 0.0
    %646 = vmatpush.msra.mxu0 0.0
    %647 = vmatpush.msra.mxu0 %v627
    %648 = vmatmul.f32.gmra.mxu0 %v630
    %v649 = vpop.f32.mrf.mxu0
    %v650 = vadd.f32 0.0, %v649
    %651 = vdwg.mxu0
    %652 = vrot.lane.b32.xlu0 %v110, 112
    %v653 = vpop.permute.xlu0 %652
    %v656 = vsel %vm142, %v502, 0
    %658 = vmatpush.msra.mxu0 0.0
    %659 = vmatpush.msra.mxu0 0.0
    %660 = vmatpush.msra.mxu0 0.0
    %661 = vmatpush.msra.mxu0 0.0
    %662 = vmatpush.msra.mxu0 0.0
    %663 = vmatpush.msra.mxu0 0.0
    %664 = vmatpush.msra.mxu0 0.0
    %665 = vmatpush.msra.mxu0 0.0
    %666 = vmatpush.msra.mxu0 0.0
    %667 = vmatpush.msra.mxu0 0.0
    %668 = vmatpush.msra.mxu0 0.0
    %669 = vmatpush.msra.mxu0 0.0
    %670 = vmatpush.msra.mxu0 0.0
    %671 = vmatpush.msra.mxu0 0.0
    %672 = vmatpush.msra.mxu0 0.0
    %673 = vmatpush.msra.mxu0 %v653
    %674 = vmatmul.f32.gmra.mxu0 %v656
    %v675 = vpop.f32.mrf.mxu0
    %v676 = vadd.f32 0.0, %v675
    %677 = vdwg.mxu0
    %678 = vrot.lane.b32.xlu0 %v113, 112
    %v679 = vpop.permute.xlu0 %678
    %v682 = vsel %vm142, %v517, 0
    %684 = vmatpush.msra.mxu0 0.0
    %685 = vmatpush.msra.mxu0 0.0
    %686 = vmatpush.msra.mxu0 0.0
    %687 = vmatpush.msra.mxu0 0.0
    %688 = vmatpush.msra.mxu0 0.0
    %689 = vmatpush.msra.mxu0 0.0
    %690 = vmatpush.msra.mxu0 0.0
    %691 = vmatpush.msra.mxu0 0.0
    %692 = vmatpush.msra.mxu0 0.0
    %693 = vmatpush.msra.mxu0 0.0
    %694 = vmatpush.msra.mxu0 0.0
    %695 = vmatpush.msra.mxu0 0.0
    %696 = vmatpush.msra.mxu0 0.0
    %697 = vmatpush.msra.mxu0 0.0
    %698 = vmatpush.msra.mxu0 0.0
    %699 = vmatpush.msra.mxu0 %v679
    %700 = vmatmul.f32.gmra.mxu0 %v682
    %v701 = vpop.f32.mrf.mxu0
    %v702 = vadd.f32 0.0, %v701
    %703 = vdwg.mxu0
    %704 = vrot.lane.b32.xlu0 %v133, 112
    %v705 = vpop.permute.xlu0 %704
    %v708 = vsel %vm142, %v532, 0
    %710 = vmatpush.msra.mxu0 0.0
    %711 = vmatpush.msra.mxu0 0.0
    %712 = vmatpush.msra.mxu0 0.0
    %713 = vmatpush.msra.mxu0 0.0
    %714 = vmatpush.msra.mxu0 0.0
    %715 = vmatpush.msra.mxu0 0.0
    %716 = vmatpush.msra.mxu0 0.0
    %717 = vmatpush.msra.mxu0 0.0
    %718 = vmatpush.msra.mxu0 0.0
    %719 = vmatpush.msra.mxu0 0.0
    %720 = vmatpush.msra.mxu0 0.0
    %721 = vmatpush.msra.mxu0 0.0
    %722 = vmatpush.msra.mxu0 0.0
    %723 = vmatpush.msra.mxu0 0.0
    %724 = vmatpush.msra.mxu0 0.0
    %725 = vmatpush.msra.mxu0 %v705
    %726 = vmatmul.f32.gmra.mxu0 %v708
    %v727 = vpop.f32.mrf.mxu0
    %v728 = vadd.f32 0.0, %v727
    %729 = vdwg.mxu0
    %730 = vrot.lane.b32.xlu0 %v136, 112
    %v731 = vpop.permute.xlu0 %730
    %v734 = vsel %vm142, %v547, 0
    %736 = vmatpush.msra.mxu0 0.0
    %737 = vmatpush.msra.mxu0 0.0
    %738 = vmatpush.msra.mxu0 0.0
    %739 = vmatpush.msra.mxu0 0.0
    %740 = vmatpush.msra.mxu0 0.0
    %741 = vmatpush.msra.mxu0 0.0
    %742 = vmatpush.msra.mxu0 0.0
    %743 = vmatpush.msra.mxu0 0.0
    %744 = vmatpush.msra.mxu0 0.0
    %745 = vmatpush.msra.mxu0 0.0
    %746 = vmatpush.msra.mxu0 0.0
    %747 = vmatpush.msra.mxu0 0.0
    %748 = vmatpush.msra.mxu0 0.0
    %749 = vmatpush.msra.mxu0 0.0
    %750 = vmatpush.msra.mxu0 0.0
    %751 = vmatpush.msra.mxu0 %v731
    %752 = vmatmul.f32.gmra.mxu0 %v734
    %v753 = vpop.f32.mrf.mxu0
    %v754 = vadd.f32 0.0, %v753
    %755 = vdwg.mxu0
    %v756 = vld [vmem:[%s2] sm:$0xff]
    %v757 = vld [vmem:[%s2 + $0x8] sm:$0xff]
    %v758 = vld [vmem:[%s2 + $0x10] sm:$0xff]
    %v759 = vld [vmem:[%s2 + $0x18] sm:$0xff]
    %v761 = vsel %vm142, %v572, 0
    %v764 = vsel %vm142, %v598, 0
    %766 = vmatpush.msra.mxu0 0.0
    %767 = vmatpush.msra.mxu0 0.0
    %768 = vmatpush.msra.mxu0 0.0
    %769 = vmatpush.msra.mxu0 0.0
    %770 = vmatpush.msra.mxu0 0.0
    %771 = vmatpush.msra.mxu0 0.0
    %772 = vmatpush.msra.mxu0 0.0
    %773 = vmatpush.msra.mxu0 0.0
    %774 = vmatpush.msra.mxu0 0.0
    %775 = vmatpush.msra.mxu0 0.0
    %776 = vmatpush.msra.mxu0 0.0
    %777 = vmatpush.msra.mxu0 0.0
    %778 = vmatpush.msra.mxu0 0.0
    %779 = vmatpush.msra.mxu0 0.0
    %780 = vmatpush.msra.mxu0 0.0
    %781 = vmatpush.msra.mxu0 %v756
    %782 = vmatmul.f32.gmra.mxu0 %v761
    %v783 = vpop.f32.mrf.mxu0
    %v784 = vadd.f32 0.0, %v783
    %785 = vmatmul.f32.gmra.mxu0 %v764
    %v786 = vpop.f32.mrf.mxu0
    %v787 = vadd.f32 0.0, %v786
    %788 = vdwg.mxu0
    %v790 = vsel %vm142, %v624, 0
    %v793 = vsel %vm142, %v650, 0
    %795 = vmatpush.msra.mxu0 0.0
    %796 = vmatpush.msra.mxu0 0.0
    %797 = vmatpush.msra.mxu0 0.0
    %798 = vmatpush.msra.mxu0 0.0
    %799 = vmatpush.msra.mxu0 0.0
    %800 = vmatpush.msra.mxu0 0.0
    %801 = vmatpush.msra.mxu0 0.0
    %802 = vmatpush.msra.mxu0 0.0
    %803 = vmatpush.msra.mxu0 0.0
    %804 = vmatpush.msra.mxu0 0.0
    %805 = vmatpush.msra.mxu0 0.0
    %806 = vmatpush.msra.mxu0 0.0
    %807 = vmatpush.msra.mxu0 0.0
    %808 = vmatpush.msra.mxu0 0.0
    %809 = vmatpush.msra.mxu0 0.0
    %810 = vmatpush.msra.mxu0 %v757
    %811 = vmatmul.f32.gmra.mxu0 %v790
    %v812 = vpop.f32.mrf.mxu0
    %v813 = vadd.f32 0.0, %v812
    %814 = vmatmul.f32.gmra.mxu0 %v793
    %v815 = vpop.f32.mrf.mxu0
    %v816 = vadd.f32 0.0, %v815
    %817 = vdwg.mxu0
    %v819 = vsel %vm142, %v676, 0
    %v822 = vsel %vm142, %v702, 0
    %824 = vmatpush.msra.mxu0 0.0
    %825 = vmatpush.msra.mxu0 0.0
    %826 = vmatpush.msra.mxu0 0.0
    %827 = vmatpush.msra.mxu0 0.0
    %828 = vmatpush.msra.mxu0 0.0
    %829 = vmatpush.msra.mxu0 0.0
    %830 = vmatpush.msra.mxu0 0.0
    %831 = vmatpush.msra.mxu0 0.0
    %832 = vmatpush.msra.mxu0 0.0
    %833 = vmatpush.msra.mxu0 0.0
    %834 = vmatpush.msra.mxu0 0.0
    %835 = vmatpush.msra.mxu0 0.0
    %836 = vmatpush.msra.mxu0 0.0
    %837 = vmatpush.msra.mxu0 0.0
    %838 = vmatpush.msra.mxu0 0.0
    %839 = vmatpush.msra.mxu0 %v758
    %840 = vmatmul.f32.gmra.mxu0 %v819
    %v841 = vpop.f32.mrf.mxu0
    %v842 = vadd.f32 0.0, %v841
    %843 = vmatmul.f32.gmra.mxu0 %v822
    %v844 = vpop.f32.mrf.mxu0
    %v845 = vadd.f32 0.0, %v844
    %846 = vdwg.mxu0
    %v848 = vsel %vm142, %v728, 0
    %v851 = vsel %vm142, %v754, 0
    %853 = vmatpush.msra.mxu0 0.0
    %854 = vmatpush.msra.mxu0 0.0
    %855 = vmatpush.msra.mxu0 0.0
    %856 = vmatpush.msra.mxu0 0.0
    %857 = vmatpush.msra.mxu0 0.0
    %858 = vmatpush.msra.mxu0 0.0
    %859 = vmatpush.msra.mxu0 0.0
    %860 = vmatpush.msra.mxu0 0.0
    %861 = vmatpush.msra.mxu0 0.0
    %862 = vmatpush.msra.mxu0 0.0
    %863 = vmatpush.msra.mxu0 0.0
    %864 = vmatpush.msra.mxu0 0.0
    %865 = vmatpush.msra.mxu0 0.0
    %866 = vmatpush.msra.mxu0 0.0
    %867 = vmatpush.msra.mxu0 0.0
    %868 = vmatpush.msra.mxu0 %v759
    %869 = vmatmul.f32.gmra.mxu0 %v848
    %v870 = vpop.f32.mrf.mxu0
    %v871 = vadd.f32 0.0, %v870
    %872 = vmatmul.f32.gmra.mxu0 %v851
    %v873 = vpop.f32.mrf.mxu0
    %v874 = vadd.f32 0.0, %v873
    %875 = vdwg.mxu0
    %v876 = vsel %vm39, %v784, 0.0
    %v877 = vsel %vm39, %v813, 0.0
    %v878 = vadd.f32 %v876, %v877
    %v879 = vsel %vm39, %v842, 0.0
    %v880 = vadd.f32 %v878, %v879
    %v881 = vsel %vm39, %v871, 0.0
    %v882 = vadd.f32 %v880, %v881
    %v883 = vsel %vm39, %v787, 0.0
    %v884 = vsel %vm39, %v816, 0.0
    %v885 = vadd.f32 %v883, %v884
    %v886 = vsel %vm39, %v845, 0.0
    %v887 = vadd.f32 %v885, %v886
    %v888 = vsel %vm39, %v874, 0.0
    %v889 = vadd.f32 %v887, %v888
    %v890 = vld [vmem:[%s3] sm:$0x1]
    %v892 = vperm.slane %v890, 0
    %v894 = vadd.f32 %v882, %v892
    %v895 = vadd.f32 %v889, %v892
    %896 = vst.msk [vmem:[#allocation2] sm:$0xff] %vm39, %v894
    %897 = vst.msk [vmem:[#allocation2 + $0x8] sm:$0xff] %vm39, %v895
    // Predicated region
    $region22: #{tpu_custom_call.1} parent=1 // pred_check
      _
    $region23: #{tpu_custom_call.1} parent=1 // pred_check_branch
      %899 = sbr.rel (0) target = $region25
    $region24: #{tpu_custom_call.1} parent=1 // pred_region
      %901 = vsyncadd [#allocation3], 0
      %s902 = sshll.u32 [#allocation2], 4
      %s903 = int_to_ptr.vmem [resolvable:$true] %s902
      %s904 = sshll.u32 %s5, 4
      %s905 = int_to_ptr.hbm [resolvable:$true] %s904
      %910 = dma.vmem_to_hbm [thread:$0]  %s903, 256, %s905, [#allocation3], 128, 128, 8
    $region25: #{tpu_custom_call.1} parent=1 // pred_fallthru
      _
    // Predicated region
    $region26: #{tpu_custom_call.1} parent=1 // pred_check
      _
    $region27: #{tpu_custom_call.1} parent=1 // pred_check_branch
      %912 = sbr.rel (0) target = $region29
    $region28: #{tpu_custom_call.1} parent=1 // pred_region
      %914 = dma.done [#allocation3], 256
    $region29: #{tpu_custom_call.1} parent=1 // pred_fallthru
      _
    %915 = vsyncpa [#allocation3], 1

</llo_original>
